<compile_context>
chip_gen: v7x
topology: tpu7x:2x2x1
jax: 0.10.0
libtpu: 0.0.40
codegen_flags: <defaults>
</compile_context>

<pallas_src>
import numpy as np
import jax
import jax.numpy as jnp
from jax.experimental import pallas as pl
from jax.experimental.pallas import tpu as pltpu


def _round_up(x, m):
    return ((x + m - 1) // m) * m


# ----------------------------- parameter init ------------------------------
def _orthogonal(key, rows, cols, gain=1.0):
    """Deterministic orthogonal init, mirroring torch.nn.init.orthogonal_."""
    big, small = max(rows, cols), min(rows, cols)
    a = jax.random.normal(key, (big, small), dtype=jnp.float32)
    q, r = jnp.linalg.qr(a)
    d = jnp.sign(jnp.diag(r))
    d = jnp.where(d == 0, 1.0, d)
    q = q * d[None, :]
    w = q if rows >= cols else q.T
    return (gain * w[:rows, :cols]).astype(jnp.float32)


def init_policy_params(key, obs_dim, hidden_size, action_dim, std_init=0.0):
    ks = jax.random.split(key, 6)
    g = float(np.sqrt(2.0))
    params = {
        # actor: Linear(D,H) Tanh Linear(H,H) Tanh      (gain sqrt(2), bias 0)
        "wa1": _orthogonal(ks[0], obs_dim, hidden_size, g),
        "ba1": jnp.zeros((1, hidden_size), jnp.float32),
        "wa2": _orthogonal(ks[1], hidden_size, hidden_size, g),
        "ba2": jnp.zeros((1, hidden_size), jnp.float32),
        # DiagGaussian fc_mean: Linear(H,A)              (gain 1, bias 0)
        "wm": _orthogonal(ks[2], hidden_size, action_dim, 1.0),
        "bm": jnp.zeros((1, action_dim), jnp.float32),
        "logstd": jnp.full((1, action_dim), float(std_init), jnp.float32),
        # critic: Linear(D,H) Tanh Linear(H,H) Tanh Linear(H,1)
        "wc1": _orthogonal(ks[3], obs_dim, hidden_size, g),
        "bc1": jnp.zeros((1, hidden_size), jnp.float32),
        "wc2": _orthogonal(ks[4], hidden_size, hidden_size, g),
        "bc2": jnp.zeros((1, hidden_size), jnp.float32),
        "wc3": _orthogonal(ks[5], hidden_size, 1, g),
        "bc3": jnp.zeros((1, 1), jnp.float32),
    }
    return params


def default_compute_dtype():
    """bf16 activations/params on v6e/v7x (bf16 VPU/EUP); f32 on v5e/older."""
    try:
        kind = jax.devices()[0].device_kind.lower()
    except Exception:
        return jnp.float32
    if "v6" in kind or "v7" in kind:
        return jnp.bfloat16
    return jnp.float32


# ------------------------- fused parameter packing --------------------------
def pack_policy_params(params, obs_dim, hidden_size, action_dim, dtype=jnp.float32):
    """Packs actor+critic weights into ONE lane-dense [R, W] buffer.

    Call this ONCE per parameter update (hoisted out of the per-step hot path),
    then pass (pbuf, meta) to make_policy_forward / the jitted forward.

    Two layouts:
      fused (2H <= 128): layer-1 [D_pad, W] (actor|critic lanes), layer-2
        block-diagonal [W, W], heads [W, Lout]. One 128-lane vreg covers both
        trunks, so the block-diag padding is free.
      split (2H > 128): Hp = round_up(H,128). layer-1 [D_pad, 2Hp] with actor in
        lanes [0,H) and critic in [Hp,Hp+H); layer-2 as two [Hp,Hp] blocks side
        by side in lanes; heads stacked along rows as [2Hp, Lout]. Avoids the 2x
        block-diagonal MXU-FLOP / param-byte tax for large H.
    All zero padding is mathematically inert (tanh(0)=0, 0-rows contribute 0).
    """
    D, H, A = obs_dim, hidden_size, action_dim
    D_pad = _round_up(D, 8)
    Lout = _round_up(A + 1, 128)
    fused = (2 * H) <= 128

    o_b1, o_b2, o_b3, o_w1 = 0, 8, 16, 24
    if fused:
        Hp = H
        W = max(_round_up(2 * H, 128), Lout)
        W1 = W                                  # layer activation width
        o_w2 = o_w1 + D_pad
        o_w3 = o_w2 + W1
        R = o_w3 + W1
        col_a, col_c = 0, H                     # actor / critic lane offsets
    else:
        Hp = _round_up(H, 128)
        W1 = 2 * Hp
        W = max(W1, Lout)
        o_w2 = o_w1 + D_pad
        o_w3 = o_w2 + Hp
        R = o_w3 + 2 * Hp
        col_a, col_c = 0, Hp

    buf = jnp.zeros((R, W), jnp.float32)
    # biases (each in its own sublane-aligned 8-row slot)
    buf = buf.at[o_b1, col_a:col_a + H].set(params["ba1"][0])
    buf = buf.at[o_b1, col_c:col_c + H].set(params["bc1"][0])
    buf = buf.at[o_b2, col_a:col_a + H].set(params["ba2"][0])
    buf = buf.at[o_b2, col_c:col_c + H].set(params["bc2"][0])
    buf = buf.at[o_b3, 0:A].set(params["bm"][0])
    buf = buf.at[o_b3, A:A + 1].set(params["bc3"][0])
    # layer 1: actor | critic side by side in lanes
    buf = buf.at[o_w1:o_w1 + D, col_a:col_a + H].set(params["wa1"])
    buf = buf.at[o_w1:o_w1 + D, col_c:col_c + H].set(params["wc1"])
    if fused:
        # layer 2: block diagonal [W1, W1]
        buf = buf.at[o_w2:o_w2 + H, 0:H].set(params["wa2"])
        buf = buf.at[o_w2 + H:o_w2 + 2 * H, H:2 * H].set(params["wc2"])
        # heads: [W1, Lout] (mean cols [0,A), value col A)
        buf = buf.at[o_w3:o_w3 + H, 0:A].set(params["wm"])
        buf = buf.at[o_w3 + H:o_w3 + 2 * H, A:A + 1].set(params["wc3"])
    else:
        # layer 2: two dense [Hp, Hp] blocks side by side in lanes
        buf = buf.at[o_w2:o_w2 + H, 0:H].set(params["wa2"])
        buf = buf.at[o_w2:o_w2 + H, Hp:Hp + H].set(params["wc2"])
        # heads stacked along rows: actor rows then critic rows, lanes [0,Lout)
        buf = buf.at[o_w3:o_w3 + H, 0:A].set(params["wm"])
        buf = buf.at[o_w3 + Hp:o_w3 + Hp + H, A:A + 1].set(params["wc3"])
    buf = buf.astype(dtype)

    meta = dict(D=D, H=H, A=A, D_pad=D_pad, Hp=Hp, W1=W1, W=W, Lout=Lout,
                fused=fused, R=R, dtype=jnp.dtype(dtype),
                o_b1=o_b1, o_b2=o_b2, o_b3=o_b3,
                o_w1=o_w1, o_w2=o_w2, o_w3=o_w3)
    return buf, meta


# -------------------------------- kernel -----------------------------------
def _make_policy_kernel(meta):
    D_pad, Hp, W1, Lout = meta["D_pad"], meta["Hp"], meta["W1"], meta["Lout"]
    fused = meta["fused"]
    o_b1, o_b2, o_b3 = meta["o_b1"], meta["o_b2"], meta["o_b3"]
    o_w1, o_w2, o_w3 = meta["o_w1"], meta["o_w2"], meta["o_w3"]
    cdt = meta["dtype"]            # compute dtype (bf16 on v6e/v7x, f32 on v5e)
    f32 = jnp.float32

    def kernel(obs_ref, p_ref, out_ref):
        x = obs_ref[...].astype(cdt)                       # [TB, D_pad]
        # static, sublane/lane-aligned views into the packed parameter buffer
        w1 = p_ref[o_w1:o_w1 + D_pad, 0:W1]                # [D_pad, W1]
        b1 = p_ref[o_b1:o_b1 + 1, 0:W1]
        b2 = p_ref[o_b2:o_b2 + 1, 0:W1]
        b3 = p_ref[o_b3:o_b3 + 1, 0:Lout]

        # layer 1: fused actor+critic, f32 MXU accumulation, tanh in `cdt`
        h1 = jnp.tanh((jnp.dot(x, w1, preferred_element_type=f32) + b1).astype(cdt))

        if fused:
            # layer 2: block-diagonal [W1, W1]; heads [W1, Lout]
            w2 = p_ref[o_w2:o_w2 + W1, 0:W1]
            h2 = jnp.tanh((jnp.dot(h1, w2, preferred_element_type=f32) + b2).astype(cdt))
            w3 = p_ref[o_w3:o_w3 + W1, 0:Lout]
            y = jnp.dot(h2, w3, preferred_element_type=f32) + b3
        else:
            # layer 2: two dense [Hp, Hp] matmuls (no block-diag FLOP tax)
            w2a = p_ref[o_w2:o_w2 + Hp, 0:Hp]
            w2c = p_ref[o_w2:o_w2 + Hp, Hp:2 * Hp]
            h2a = jnp.tanh((jnp.dot(h1[:, :Hp], w2a, preferred_element_type=f32)
                            + b2[:, :Hp]).astype(cdt))
            h2c = jnp.tanh((jnp.dot(h1[:, Hp:], w2c, preferred_element_type=f32)
                            + b2[:, Hp:]).astype(cdt))
            # heads: mean from actor trunk, value from critic trunk
            w3a = p_ref[o_w3:o_w3 + Hp, 0:Lout]
            w3c = p_ref[o_w3 + Hp:o_w3 + 2 * Hp, 0:Lout]
            y = (jnp.dot(h2a, w3a, preferred_element_type=f32)
                 + jnp.dot(h2c, w3c, preferred_element_type=f32) + b3)

        # lane-dense output slab: cols [0,A) = mean, col A = value, rest zeros
        out_ref[...] = y.astype(out_ref.dtype)

    return kernel


def _choose_tile_b(B):
    """Batch tile: >=2 grid steps whenever there is enough work (so v7x's two
    TensorCores both run under dimension_semantics=("parallel",)), tiles up to
    2048 rows to amortize the ~0.35us per-grid-step overhead."""
    if B <= 128:
        return B                     # latency path: single step
    return min(2048, _round_up(pl.cdiv(B, 2), 8))


# ------------------------------- wrapper ------------------------------------
def make_policy_forward(meta):
    """Returns a jitted forward(obs, hxs, masks, pbuf, logstd) ->
    (action_mean, action_std, value_preds, hxs).

    Equivalent to Policy.get_action_dist(...) params + Policy.get_value(...).
    pbuf must come from pack_policy_params with the same meta (packed ONCE,
    outside the hot path). The mean/value slicing and exp(logstd) broadcast are
    inside the jit so they fuse with downstream consumers.
    """
    D_pad, Hp, W1, W, Lout = meta["D_pad"], meta["Hp"], meta["W1"], meta["W"], meta["Lout"]
    A, R, fused = meta["A"], meta["R"], meta["fused"]
    p_itemsize = meta["dtype"].itemsize
    kernel = _make_policy_kernel(meta)

    def forward(obs, hxs, masks, pbuf, logstd):
        del masks                                   # identity rnn_encoder ignores masks
        B = obs.shape[0]
        if obs.shape[1] != D_pad:                   # keep w1 sublane view zero-cost
            obs = jnp.pad(obs, ((0, 0), (0, D_pad - obs.shape[1])))

        tile_b = _choose_tile_b(B)
        grid = (pl.cdiv(B, tile_b),)

        # VMEM: double-buffered obs/out tiles (obs lane-padded to 128) + resident
        # packed params + live h1/h2 activations; clamp to a tight-but-safe range.
        tb8 = _round_up(tile_b, 8)
        need = (2 * tb8 * _round_up(D_pad, 128) * 4
                + 2 * tb8 * Lout * 4
                + 2 * R * W * p_itemsize
                + 4 * tb8 * W1 * 4)
        vmem_limit = int(min(32 << 20, max(8 << 20, 2 * need)))

        if fused:
            flops = 2 * B * (D_pad * W1 + W1 * W1 + W1 * Lout)
            trans = 2 * B * W1
        else:
            flops = 2 * B * (D_pad * W1 + 2 * Hp * Hp + 2 * Hp * Lout)
            trans = B * (W1 + 2 * Hp)
        cost = pl.CostEstimate(
            flops=int(flops), transcendentals=int(trans),
            bytes_accessed=int(4 * B * D_pad + R * W * p_itemsize + 4 * B * Lout))

        out = pl.pallas_call(
            kernel,
            out_shape=jax.ShapeDtypeStruct((B, Lout), jnp.float32),
            grid=grid,
            in_specs=[
                pl.BlockSpec((tile_b, D_pad), lambda i: (i, 0)),   # obs: batch-tiled
                pl.BlockSpec((R, W), lambda i: (0, 0)),            # params: VMEM-resident
            ],
            out_specs=pl.BlockSpec((tile_b, Lout), lambda i: (i, 0)),
            compiler_params=pltpu.CompilerParams(
                dimension_semantics=("parallel",),
                vmem_limit_bytes=vmem_limit,
            ),
            cost_estimate=cost,
        )(obs, pbuf)

        mean = out[:, :A]
        value = out[:, A:A + 1]
        # std is batch-independent: broadcast exp(logstd) in JAX (fused by XLA).
        std = jnp.broadcast_to(jnp.exp(logstd.astype(jnp.float32)), mean.shape)
        return mean, std, value, hxs

    return jax.jit(forward)


# --------------------------------- test --------------------------------------
if __name__ == "__main__":
    key = jax.random.PRNGKey(0)
    k_obs1, k_par1, k_obs2, k_par2 = jax.random.split(key, 4)

    def reference(obs, p):
        hi = jax.lax.Precision.HIGHEST
        dot = lambda a, b: jnp.dot(a, b, precision=hi)
        a1 = jnp.tanh(dot(obs, p["wa1"]) + p["ba1"])
        a2 = jnp.tanh(dot(a1, p["wa2"]) + p["ba2"])
        m = dot(a2, p["wm"]) + p["bm"]
        s = jnp.broadcast_to(jnp.exp(p["logstd"]), m.shape)
        c1 = jnp.tanh(dot(obs, p["wc1"]) + p["bc1"])
        c2 = jnp.tanh(dot(c1, p["wc2"]) + p["bc2"])
        v = dot(c2, p["wc3"]) + p["bc3"]
        return m, s, v

    # --- config 1: tiny act-path shapes, fused layout, exact f32 parity ------
    B1, D1, H1, A1 = 2, 16, 32, 8
    params1 = init_policy_params(k_par1, D1, H1, A1, std_init=0.0)
    obs1 = jax.random.normal(k_obs1, (B1, D1), dtype=jnp.float32)
    hxs1 = jnp.zeros((B1, H1), jnp.float32)
    masks1 = jnp.ones((B1, 1), jnp.float32)

    pbuf1, meta1 = pack_policy_params(params1, D1, H1, A1, dtype=jnp.float32)  # packed ONCE
    fwd1 = make_policy_forward(meta1)
    mean1, std1, val1, hxs1_o = fwd1(obs1, hxs1, masks1, pbuf1, params1["logstd"])
    jax.block_until_ready((mean1, std1, val1, hxs1_o))

    m_r, s_r, v_r = reference(obs1, params1)
    np.testing.assert_allclose(np.asarray(mean1), np.asarray(m_r), rtol=1e-4, atol=1e-4)
    np.testing.assert_allclose(np.asarray(std1), np.asarray(s_r), rtol=1e-4, atol=1e-4)
    np.testing.assert_allclose(np.asarray(val1), np.asarray(v_r), rtol=1e-4, atol=1e-4)

    # --- config 2: larger batch, H=128 split layout, multi-step grid, partial
    # last tile, obs_dim not a multiple of 8, auto (bf16 on v6e/v7x) dtype -----
    B2, D2, H2, A2 = 520, 20, 128, 6
    params2 = init_policy_params(k_par2, D2, H2, A2, std_init=-0.5)
    obs2 = jax.random.normal(k_obs2, (B2, D2), dtype=jnp.float32)
    hxs2 = jnp.zeros((B2, H2), jnp.float32)
    masks2 = jnp.ones((B2, 1), jnp.float32)

    cdt = default_compute_dtype()
    pbuf2, meta2 = pack_policy_params(params2, D2, H2, A2, dtype=cdt)
    fwd2 = make_policy_forward(meta2)
    mean2, std2, val2, _ = fwd2(obs2, hxs2, masks2, pbuf2, params2["logstd"])
    jax.block_until_ready((mean2, std2, val2))

    m_r2, s_r2, v_r2 = reference(obs2, params2)
    tol = 1e-1 if cdt == jnp.bfloat16 else 2e-3
    np.testing.assert_allclose(np.asarray(mean2), np.asarray(m_r2), rtol=tol, atol=tol)
    np.testing.assert_allclose(np.asarray(std2), np.asarray(s_r2), rtol=1e-4, atol=1e-4)
    np.testing.assert_allclose(np.asarray(val2), np.asarray(v_r2), rtol=tol, atol=tol)

    print("KERNEL_OK")
</pallas_src>

<mosaic_0001>
module attributes {stable_mosaic.version = 11 : i64} {
  func.func @kernel(%arg0: i32, %arg1: memref<2x16xf32, #tpu.memory_space<vmem>>, %arg2: memref<296x128xf32, #tpu.memory_space<vmem>>, %arg3: memref<2x128xf32, #tpu.memory_space<vmem>>) attributes {dimension_semantics = [#tpu.dimension_semantics<parallel>], iteration_bounds = array<i64: 1>, scalar_prefetch = 0 : i64, scratch_operands = 0 : i64, tpu.core_type = #tpu.core_type<tc>, window_params = [{transform_indices = @transform_0, window_bounds = array<i64: 2, 16>}, {pipeline_mode = #tpu.pipeline_mode<synchronous>, transform_indices = @transform_1, window_bounds = array<i64: 296, 128>}, {transform_indices = @transform_2, window_bounds = array<i64: 2, 128>}]} {
    %c0 = arith.constant 0 : index
    %c0_0 = arith.constant 0 : index
    %0 = vector.load %arg1[%c0, %c0_0] : memref<2x16xf32, #tpu.memory_space<vmem>>, vector<2x16xf32>
    %c24 = arith.constant 24 : index
    %c0_1 = arith.constant 0 : index
    %1 = vector.load %arg2[%c24, %c0_1] : memref<296x128xf32, #tpu.memory_space<vmem>>, vector<16x128xf32>
    %c0_2 = arith.constant 0 : index
    %c0_3 = arith.constant 0 : index
    %2 = vector.load %arg2[%c0_2, %c0_3] : memref<296x128xf32, #tpu.memory_space<vmem>>, vector<1x128xf32>
    %c8 = arith.constant 8 : index
    %c0_4 = arith.constant 0 : index
    %3 = vector.load %arg2[%c8, %c0_4] : memref<296x128xf32, #tpu.memory_space<vmem>>, vector<1x128xf32>
    %c16 = arith.constant 16 : index
    %c0_5 = arith.constant 0 : index
    %4 = vector.load %arg2[%c16, %c0_5] : memref<296x128xf32, #tpu.memory_space<vmem>>, vector<1x128xf32>
    %cst = arith.constant dense<0.000000e+00> : vector<2x128xf32>
    %5 = tpu.matmul %0, %1, %cst {dimension_numbers = #tpu.dot_dimension_numbers<[1], [0], [0], [1], [0, 0, 1, 1], [], []>} : vector<2x16xf32>, vector<16x128xf32>, vector<2x128xf32> -> vector<2x128xf32>
    %6 = vector.broadcast %2 : vector<1x128xf32> to vector<2x128xf32>
    %7 = arith.addf %5, %6 : vector<2x128xf32>
    %8 = math.tanh %7 : vector<2x128xf32>
    %c40 = arith.constant 40 : index
    %c0_6 = arith.constant 0 : index
    %9 = vector.load %arg2[%c40, %c0_6] : memref<296x128xf32, #tpu.memory_space<vmem>>, vector<128x128xf32>
    %cst_7 = arith.constant dense<0.000000e+00> : vector<2x128xf32>
    %10 = tpu.matmul %8, %9, %cst_7 {dimension_numbers = #tpu.dot_dimension_numbers<[1], [0], [0], [1], [0, 0, 1, 1], [], []>} : vector<2x128xf32>, vector<128x128xf32>, vector<2x128xf32> -> vector<2x128xf32>
    %11 = vector.broadcast %3 : vector<1x128xf32> to vector<2x128xf32>
    %12 = arith.addf %10, %11 : vector<2x128xf32>
    %13 = math.tanh %12 : vector<2x128xf32>
    %c168 = arith.constant 168 : index
    %c0_8 = arith.constant 0 : index
    %14 = vector.load %arg2[%c168, %c0_8] : memref<296x128xf32, #tpu.memory_space<vmem>>, vector<128x128xf32>
    %cst_9 = arith.constant dense<0.000000e+00> : vector<2x128xf32>
    %15 = tpu.matmul %13, %14, %cst_9 {dimension_numbers = #tpu.dot_dimension_numbers<[1], [0], [0], [1], [0, 0, 1, 1], [], []>} : vector<2x128xf32>, vector<128x128xf32>, vector<2x128xf32> -> vector<2x128xf32>
    %16 = vector.broadcast %4 : vector<1x128xf32> to vector<2x128xf32>
    %17 = arith.addf %15, %16 : vector<2x128xf32>
    %c0_10 = arith.constant 0 : index
    %c0_11 = arith.constant 0 : index
    %18 = vector.load %arg3[%c0_10, %c0_11] : memref<2x128xf32, #tpu.memory_space<vmem>>, vector<2x128xf32>
    tpu.vector_store %arg3[%c0_10, %c0_11], %17 {strides = array<i32>} : memref<2x128xf32, #tpu.memory_space<vmem>>, vector<2x128xf32>,
    return
  }
  func.func @transform_0(%arg0: i32) -> (i32, i32) {
    %c0_i32 = arith.constant 0 : i32
    %c0_i32_0 = arith.constant 0 : i32
    return %arg0, %c0_i32 : i32, i32
  }
  func.func @transform_1(%arg0: i32) -> (i32, i32) {
    %c0_i32 = arith.constant 0 : i32
    %c0_i32_0 = arith.constant 0 : i32
    %c0_i32_1 = arith.constant 0 : i32
    return %c0_i32, %c0_i32_0 : i32, i32
  }
  func.func @transform_2(%arg0: i32) -> (i32, i32) {
    %c0_i32 = arith.constant 0 : i32
    %c0_i32_0 = arith.constant 0 : i32
    return %arg0, %c0_i32 : i32, i32
  }
}

</mosaic_0001>

<llo_original>
// kernel: forward.1
$region0: #{forward.1}
  #allocation0 [shape = 'u32[]', space=smem, size = 0x4, offset = 0x4, fixed_abs, tag = 'smem constant byte address 0x4 - core index']
  #allocation1 [shape = 'u32[144,128]{1,0:T(1,128)}', space=vmem, size = 0x12000, scoped, tag = 'internal scratch']
  %s0 = inlined_call_operand.vmem [shape: f32[2,16], index: 0, kind: input, shape index: {}]
  %s1 = inlined_call_operand.hbm [shape: f32[296,128], index: 1, kind: input, shape index: {}]
  %s2 = inlined_call_operand.vmem [shape: f32[2,128], index: 2, kind: output, shape index: {}]
  %s3 = sld [smem:[#allocation0]]
  $region22: #{forward.1} parent=0
    _
  %s5 = ssub.s32 1, %s3
  %s6 = scalar_select 0, %s5, %s3
  $region1: #{forward.1} parent=0
    #allocation2 [shape = 'u8[151552]{0}', space=vmem, size = 0x25000, scoped, tag = 'input window, operand 1, single buffered']
    #allocation3 [shape = 's32[1]{0}', space=sflag, size = 0x4, scoped, tag = 'scoped memory for forward.1']
    %7 = vsyncpa [#allocation3], 0
    // Predicated region
    $region2: #{forward.1} parent=1 // pred_check
      _
    $region3: #{forward.1} parent=1 // pred_check_branch
      %9 = sbr.rel (0) target = $region5
    $region4: #{forward.1} parent=1 // pred_region
      _
    $region5: #{forward.1} parent=1 // pred_fallthru
      _
    // Predicated region
    $region6: #{forward.1} parent=1 // pred_check
      _
    $region7: #{forward.1} parent=1 // pred_check_branch
      %11 = sbr.rel (0) target = $region9
    $region8: #{forward.1} parent=1 // pred_region
      %s13 = ssub.s32 4736, 4736
      %14 = vsyncadd [#allocation3], %s13
      %s15 = sshll.u32 [#allocation2], 4
      %s16 = int_to_ptr.vmem [resolvable:$true] %s15
      %21 = dma.hbm_to_vmem [thread:$0]  %s1, 4736, %s16, [#allocation3], 128, 128, 8
    $region9: #{forward.1} parent=1 // pred_fallthru
      _
    // Predicated region
    $region10: #{forward.1} parent=1 // pred_check
      _
    $region11: #{forward.1} parent=1 // pred_check_branch
      %23 = sbr.rel (0) target = $region13
    $region12: #{forward.1} parent=1 // pred_region
      %24 = dma.done [#allocation3], 4736
    $region13: #{forward.1} parent=1 // pred_fallthru
      _
    %v25 = vld [vmem:[%s0] sm:$0x3]
    %v26 = vld [vmem:[#allocation2 + $0x18] sm:$0xff]
    %v27 = vld [vmem:[#allocation2 + $0x20] sm:$0xff]
    %v28 = vld [vmem:[#allocation2] sm:$0x1]
    %v29 = vld [vmem:[#allocation2 + $0x8] sm:$0x1]
    %v30 = vld [vmem:[#allocation2 + $0x10] sm:$0x1]
    %v31 = vlaneseq
    %v32 = vshrl.u32 %v31, 7
    %v33 = vsub.s32 0, %v32
    %v34 = vrot.slane %v28, %v33
    %vm35 = vcmask 130048
    %v37 = vsel %vm35, %v25, 0
    %39 = vmatprep.subr.mxu0 0.0
    %40 = vmatpush1.msra.mxu0 %v26
    %41 = vmatprep.subr.mxu0 0.0
    %42 = vmatpush1.msra.mxu0 %v27
    %43 = vmatprep.subr.mxu0 0.0
    %44 = vmatpush1.msra.mxu0 0.0
    %45 = vmatprep.subr.mxu0 0.0
    %46 = vmatpush1.msra.mxu0 0.0
    %47 = vmatprep.subr.mxu0 0.0
    %48 = vmatpush1.msra.mxu0 0.0
    %49 = vmatprep.subr.mxu0 0.0
    %50 = vmatpush1.msra.mxu0 0.0
    %51 = vmatprep.subr.mxu0 0.0
    %52 = vmatpush1.msra.mxu0 0.0
    %53 = vmatprep.subr.mxu0 0.0
    %54 = vmatpush1.msra.mxu0 0.0
    %55 = vmatprep.subr.mxu0 0.0
    %56 = vmatpush1.msra.mxu0 0.0
    %57 = vmatprep.subr.mxu0 0.0
    %58 = vmatpush1.msra.mxu0 0.0
    %59 = vmatprep.subr.mxu0 0.0
    %60 = vmatpush1.msra.mxu0 0.0
    %61 = vmatprep.subr.mxu0 0.0
    %62 = vmatpush1.msra.mxu0 0.0
    %63 = vmatprep.subr.mxu0 0.0
    %64 = vmatpush1.msra.mxu0 0.0
    %65 = vmatprep.subr.mxu0 0.0
    %66 = vmatpush1.msra.mxu0 0.0
    %67 = vmatprep.subr.mxu0 0.0
    %68 = vmatpush1.msra.mxu0 0.0
    %69 = vmatprep.subr.mxu0 0.0
    %70 = vmatpush1.msra.mxu0 0.0
    %71 = vmatprep.subr.mxu0 0.0
    %72 = vmatpush1.msra.mxu0 0.0
    %73 = vmatprep.subr.mxu0 0.0
    %74 = vmatpush1.msra.mxu0 0.0
    %75 = vmatprep.subr.mxu0 0.0
    %76 = vmatpush1.msra.mxu0 0.0
    %77 = vmatprep.subr.mxu0 0.0
    %78 = vmatpush1.msra.mxu0 0.0
    %79 = vmatprep.subr.mxu0 0.0
    %80 = vmatpush1.msra.mxu0 0.0
    %81 = vmatprep.subr.mxu0 0.0
    %82 = vmatpush1.msra.mxu0 0.0
    %83 = vmatprep.subr.mxu0 0.0
    %84 = vmatpush1.msra.mxu0 0.0
    %85 = vmatprep.subr.mxu0 0.0
    %86 = vmatpush1.msra.mxu0 0.0
    %87 = vmatprep.subr.mxu0 0.0
    %88 = vmatpush1.msra.mxu0 0.0
    %89 = vmatprep.subr.mxu0 0.0
    %90 = vmatpush1.msra.mxu0 0.0
    %91 = vmatprep.subr.mxu0 0.0
    %92 = vmatpush1.msra.mxu0 0.0
    %93 = vmatprep.subr.mxu0 0.0
    %94 = vmatpush1.msra.mxu0 0.0
    %95 = vmatprep.subr.mxu0 0.0
    %96 = vmatpush1.msra.mxu0 0.0
    %97 = vmatprep.subr.mxu0 0.0
    %98 = vmatpush1.msra.mxu0 0.0
    %99 = vmatprep.subr.mxu0 0.0
    %100 = vmatpush1.msra.mxu0 0.0
    %101 = vmatprep.subr.mxu0 0.0
    %102 = vmatpush1.msra.mxu0 0.0
    %103 = vmatprep.mubr.f32.mxu0 0.0
    %104 = vmatmul.mubr.f32.gmra.mrb[0].mxu0 %v37
    %v105 = vpop.f32.mrb[0].mxu0
    %v106 = vadd.f32 %v34, %v105
    %v107 = vpop.f32.mrb[0].mxu0
    %108 = vdwg.mxu0
    %v109 = vtanh.pop %v106
    %v110 = vld [vmem:[#allocation2 + $0x28] sm:$0xff]
    %v111 = vld [vmem:[#allocation2 + $0x30] sm:$0xff]
    %v112 = vld [vmem:[#allocation2 + $0x38] sm:$0xff]
    %v113 = vld [vmem:[#allocation2 + $0x40] sm:$0xff]
    %v114 = vld [vmem:[#allocation2 + $0x48] sm:$0xff]
    %v115 = vld [vmem:[#allocation2 + $0x50] sm:$0xff]
    %v116 = vld [vmem:[#allocation2 + $0x58] sm:$0xff]
    %v117 = vld [vmem:[#allocation2 + $0x60] sm:$0xff]
    %v118 = vld [vmem:[#allocation2 + $0x68] sm:$0xff]
    %v119 = vld [vmem:[#allocation2 + $0x70] sm:$0xff]
    %v120 = vld [vmem:[#allocation2 + $0x78] sm:$0xff]
    %v121 = vld [vmem:[#allocation2 + $0x80] sm:$0xff]
    %v122 = vld [vmem:[#allocation2 + $0x88] sm:$0xff]
    %v123 = vld [vmem:[#allocation2 + $0x90] sm:$0xff]
    %v124 = vld [vmem:[#allocation2 + $0x98] sm:$0xff]
    %v125 = vld [vmem:[#allocation2 + $0xa0] sm:$0xff]
    %v126 = vlaneseq
    %v127 = vshrl.u32 %v126, 7
    %v128 = vsub.s32 0, %v127
    %v129 = vrot.slane %v29, %v128
    %130 = vmatprep.subr.mxu0 0.0
    %131 = vmatpush1.msra.mxu0 %v110
    %132 = vmatprep.subr.mxu0 0.0
    %133 = vmatpush1.msra.mxu0 %v111
    %134 = vmatprep.subr.mxu0 0.0
    %135 = vmatpush1.msra.mxu0 %v112
    %136 = vmatprep.subr.mxu0 0.0
    %137 = vmatpush1.msra.mxu0 %v113
    %138 = vmatprep.subr.mxu0 0.0
    %139 = vmatpush1.msra.mxu0 %v114
    %140 = vmatprep.subr.mxu0 0.0
    %141 = vmatpush1.msra.mxu0 %v115
    %142 = vmatprep.subr.mxu0 0.0
    %143 = vmatpush1.msra.mxu0 %v116
    %144 = vmatprep.subr.mxu0 0.0
    %145 = vmatpush1.msra.mxu0 %v117
    %146 = vmatprep.subr.mxu0 0.0
    %147 = vmatpush1.msra.mxu0 %v118
    %148 = vmatprep.subr.mxu0 0.0
    %149 = vmatpush1.msra.mxu0 %v119
    %150 = vmatprep.subr.mxu0 0.0
    %151 = vmatpush1.msra.mxu0 %v120
    %152 = vmatprep.subr.mxu0 0.0
    %153 = vmatpush1.msra.mxu0 %v121
    %154 = vmatprep.subr.mxu0 0.0
    %155 = vmatpush1.msra.mxu0 %v122
    %156 = vmatprep.subr.mxu0 0.0
    %157 = vmatpush1.msra.mxu0 %v123
    %158 = vmatprep.subr.mxu0 0.0
    %159 = vmatpush1.msra.mxu0 %v124
    %160 = vmatprep.subr.mxu0 0.0
    %161 = vmatpush1.msra.mxu0 %v125
    %162 = vmatprep.subr.mxu0 0.0
    %163 = vmatpush1.msra.mxu0 0.0
    %164 = vmatprep.subr.mxu0 0.0
    %165 = vmatpush1.msra.mxu0 0.0
    %166 = vmatprep.subr.mxu0 0.0
    %167 = vmatpush1.msra.mxu0 0.0
    %168 = vmatprep.subr.mxu0 0.0
    %169 = vmatpush1.msra.mxu0 0.0
    %170 = vmatprep.subr.mxu0 0.0
    %171 = vmatpush1.msra.mxu0 0.0
    %172 = vmatprep.subr.mxu0 0.0
    %173 = vmatpush1.msra.mxu0 0.0
    %174 = vmatprep.subr.mxu0 0.0
    %175 = vmatpush1.msra.mxu0 0.0
    %176 = vmatprep.subr.mxu0 0.0
    %177 = vmatpush1.msra.mxu0 0.0
    %178 = vmatprep.subr.mxu0 0.0
    %179 = vmatpush1.msra.mxu0 0.0
    %180 = vmatprep.subr.mxu0 0.0
    %181 = vmatpush1.msra.mxu0 0.0
    %182 = vmatprep.subr.mxu0 0.0
    %183 = vmatpush1.msra.mxu0 0.0
    %184 = vmatprep.subr.mxu0 0.0
    %185 = vmatpush1.msra.mxu0 0.0
    %186 = vmatprep.subr.mxu0 0.0
    %187 = vmatpush1.msra.mxu0 0.0
    %188 = vmatprep.subr.mxu0 0.0
    %189 = vmatpush1.msra.mxu0 0.0
    %190 = vmatprep.subr.mxu0 0.0
    %191 = vmatpush1.msra.mxu0 0.0
    %192 = vmatprep.subr.mxu0 0.0
    %193 = vmatpush1.msra.mxu0 0.0
    %194 = vmatprep.mubr.f32.mxu0 0.0
    %195 = vmatmul.mubr.f32.gmra.mrb[0].mxu0 %v109
    %v196 = vpop.f32.mrb[0].mxu0
    %v197 = vadd.f32 %v129, %v196
    %v198 = vpop.f32.mrb[0].mxu0
    %199 = vdwg.mxu0
    %v200 = vtanh.pop %v197
    %v201 = vld [vmem:[#allocation2 + $0xa8] sm:$0xff]
    %v202 = vld [vmem:[#allocation2 + $0xb0] sm:$0xff]
    %v203 = vld [vmem:[#allocation2 + $0xb8] sm:$0xff]
    %v204 = vld [vmem:[#allocation2 + $0xc0] sm:$0xff]
    %v205 = vld [vmem:[#allocation2 + $0xc8] sm:$0xff]
    %v206 = vld [vmem:[#allocation2 + $0xd0] sm:$0xff]
    %v207 = vld [vmem:[#allocation2 + $0xd8] sm:$0xff]
    %v208 = vld [vmem:[#allocation2 + $0xe0] sm:$0xff]
    %v209 = vld [vmem:[#allocation2 + $0xe8] sm:$0xff]
    %v210 = vld [vmem:[#allocation2 + $0xf0] sm:$0xff]
    %v211 = vld [vmem:[#allocation2 + $0xf8] sm:$0xff]
    %v212 = vld [vmem:[#allocation2 + $0x100] sm:$0xff]
    %v213 = vld [vmem:[#allocation2 + $0x108] sm:$0xff]
    %v214 = vld [vmem:[#allocation2 + $0x110] sm:$0xff]
    %v215 = vld [vmem:[#allocation2 + $0x118] sm:$0xff]
    %v216 = vld [vmem:[#allocation2 + $0x120] sm:$0xff]
    %v217 = vlaneseq
    %v218 = vshrl.u32 %v217, 7
    %v219 = vsub.s32 0, %v218
    %v220 = vrot.slane %v30, %v219
    %221 = vmatprep.subr.mxu0 0.0
    %222 = vmatpush1.msra.mxu0 %v201
    %223 = vmatprep.subr.mxu0 0.0
    %224 = vmatpush1.msra.mxu0 %v202
    %225 = vmatprep.subr.mxu0 0.0
    %226 = vmatpush1.msra.mxu0 %v203
    %227 = vmatprep.subr.mxu0 0.0
    %228 = vmatpush1.msra.mxu0 %v204
    %229 = vmatprep.subr.mxu0 0.0
    %230 = vmatpush1.msra.mxu0 %v205
    %231 = vmatprep.subr.mxu0 0.0
    %232 = vmatpush1.msra.mxu0 %v206
    %233 = vmatprep.subr.mxu0 0.0
    %234 = vmatpush1.msra.mxu0 %v207
    %235 = vmatprep.subr.mxu0 0.0
    %236 = vmatpush1.msra.mxu0 %v208
    %237 = vmatprep.subr.mxu0 0.0
    %238 = vmatpush1.msra.mxu0 %v209
    %239 = vmatprep.subr.mxu0 0.0
    %240 = vmatpush1.msra.mxu0 %v210
    %241 = vmatprep.subr.mxu0 0.0
    %242 = vmatpush1.msra.mxu0 %v211
    %243 = vmatprep.subr.mxu0 0.0
    %244 = vmatpush1.msra.mxu0 %v212
    %245 = vmatprep.subr.mxu0 0.0
    %246 = vmatpush1.msra.mxu0 %v213
    %247 = vmatprep.subr.mxu0 0.0
    %248 = vmatpush1.msra.mxu0 %v214
    %249 = vmatprep.subr.mxu0 0.0
    %250 = vmatpush1.msra.mxu0 %v215
    %251 = vmatprep.subr.mxu0 0.0
    %252 = vmatpush1.msra.mxu0 %v216
    %253 = vmatprep.subr.mxu0 0.0
    %254 = vmatpush1.msra.mxu0 0.0
    %255 = vmatprep.subr.mxu0 0.0
    %256 = vmatpush1.msra.mxu0 0.0
    %257 = vmatprep.subr.mxu0 0.0
    %258 = vmatpush1.msra.mxu0 0.0
    %259 = vmatprep.subr.mxu0 0.0
    %260 = vmatpush1.msra.mxu0 0.0
    %261 = vmatprep.subr.mxu0 0.0
    %262 = vmatpush1.msra.mxu0 0.0
    %263 = vmatprep.subr.mxu0 0.0
    %264 = vmatpush1.msra.mxu0 0.0
    %265 = vmatprep.subr.mxu0 0.0
    %266 = vmatpush1.msra.mxu0 0.0
    %267 = vmatprep.subr.mxu0 0.0
    %268 = vmatpush1.msra.mxu0 0.0
    %269 = vmatprep.subr.mxu0 0.0
    %270 = vmatpush1.msra.mxu0 0.0
    %271 = vmatprep.subr.mxu0 0.0
    %272 = vmatpush1.msra.mxu0 0.0
    %273 = vmatprep.subr.mxu0 0.0
    %274 = vmatpush1.msra.mxu0 0.0
    %275 = vmatprep.subr.mxu0 0.0
    %276 = vmatpush1.msra.mxu0 0.0
    %277 = vmatprep.subr.mxu0 0.0
    %278 = vmatpush1.msra.mxu0 0.0
    %279 = vmatprep.subr.mxu0 0.0
    %280 = vmatpush1.msra.mxu0 0.0
    %281 = vmatprep.subr.mxu0 0.0
    %282 = vmatpush1.msra.mxu0 0.0
    %283 = vmatprep.subr.mxu0 0.0
    %284 = vmatpush1.msra.mxu0 0.0
    %285 = vmatprep.mubr.f32.mxu0 0.0
    %286 = vmatmul.mubr.f32.gmra.mrb[0].mxu0 %v200
    %v287 = vpop.f32.mrb[0].mxu0
    %v288 = vadd.f32 %v220, %v287
    %v289 = vpop.f32.mrb[0].mxu0
    %290 = vdwg.mxu0
    %291 = vst [vmem:[%s2] sm:$0x3] %v288
    // Predicated region
    $region14: #{forward.1} parent=1 // pred_check
      _
    $region15: #{forward.1} parent=1 // pred_check_branch
      %293 = sbr.rel (0) target = $region17
    $region16: #{forward.1} parent=1 // pred_region
      _
    $region17: #{forward.1} parent=1 // pred_fallthru
      _
    // Predicated region
    $region18: #{forward.1} parent=1 // pred_check
      _
    $region19: #{forward.1} parent=1 // pred_check_branch
      %295 = sbr.rel (0) target = $region21
    $region20: #{forward.1} parent=1 // pred_region
      _
    $region21: #{forward.1} parent=1 // pred_fallthru
      _
    %296 = vsyncpa [#allocation3], 1

</llo_original>
